<compile_context>
chip_gen: v6e
topology: v6e:2x2x1
jax: 0.10.0
libtpu: 0.0.40
codegen_flags: <defaults>
</compile_context>

<pallas_src>
import math
import functools

import jax
import jax.numpy as jnp
from jax.experimental import pallas as pl
from jax.experimental.pallas import tpu as pltpu


_VPAD = 128  # padded total-vocab rows (13+32+7+24[+4] = 76/80 -> 128, lane aligned)


def _fixed_embedding_table(c_in, d_model):
    """Matches FixedEmbedding's sinusoidal init (even d_model)."""
    position = jnp.arange(c_in, dtype=jnp.float32)[:, None]
    div_term = jnp.exp(jnp.arange(0, d_model, 2, dtype=jnp.float32)
                       * -(math.log(10000.0) / d_model))
    w = jnp.zeros((c_in, d_model), dtype=jnp.float32)
    w = w.at[:, 0::2].set(jnp.sin(position * div_term))
    w = w.at[:, 1::2].set(jnp.cos(position * div_term))
    return w


def build_temporal_tables(d_model, freq="h"):
    """Concatenated fixed tables (zero-padded to 128 rows) + per-feature offsets.

    Feature column -> table: 0=month(13), 1=day(32), 2=weekday(7), 3=hour(24),
    4=minute(4) only when freq == 't'.
    """
    sizes = [13, 32, 7, 24] + ([4] if freq == "t" else [])
    tabs = [_fixed_embedding_table(s, d_model) for s in sizes]
    offsets, off = [], 0
    for s in sizes:
        offsets.append(off)
        off += s
    table_cat = jnp.concatenate(tabs, axis=0)                    # (total, D)
    table_cat = jnp.pad(table_cat, ((0, _VPAD - off), (0, 0)))   # (128, D)
    return table_cat, tuple(offsets)


def _temporal_kernel(x_ref, tab_ref, o_ref, *, offsets):
    # x_ref: (1, TL, NFx) time-feature codes; tab_ref: (128, D); o_ref: (1, TL, D)
    idx = x_ref[0].astype(jnp.int32)                              # (TL, NFx)
    tl = idx.shape[0]
    lane = jax.lax.broadcasted_iota(jnp.int32, (tl, _VPAD), 1)    # (TL, 128)
    onehot = jnp.zeros((tl, _VPAD), dtype=jnp.float32)
    for f, off in enumerate(offsets):                             # tiny static unroll
        onehot = onehot + (lane == (idx[:, f:f + 1] + off)).astype(jnp.float32)
    # One MXU matmul does all lookups + the sum across features (f32 accumulate).
    o_ref[0] = jnp.dot(onehot, tab_ref[...],
                       preferred_element_type=jnp.float32).astype(o_ref.dtype)


def _pick_seq_tile(L):
    for t in (1024, 512, 256, 128, 64, 32, 16, 8):
        if L % t == 0:
            return t
    return L  # full-extent block is always legal


def temporal_embedding(x, table_cat, offsets):
    """x: [B, L, n_feat] (int or float codes). Returns [B, L, d_model] float32."""
    B, L, NF = x.shape
    D = table_cat.shape[1]
    TL = _pick_seq_tile(L)
    kernel = functools.partial(_temporal_kernel, offsets=offsets)
    return pl.pallas_call(
        kernel,
        out_shape=jax.ShapeDtypeStruct((B, L, D), jnp.float32),
        grid_spec=pltpu.PrefetchScalarGridSpec(
            num_scalar_prefetch=0,
            grid=(B, pl.cdiv(L, TL)),
            in_specs=[
                pl.BlockSpec((1, TL, NF), lambda b, l: (b, l, 0)),   # indices
                pl.BlockSpec((_VPAD, D), lambda b, l: (0, 0)),       # resident table
            ],
            out_specs=pl.BlockSpec((1, TL, D), lambda b, l: (b, l, 0)),
        ),
        compiler_params=pltpu.CompilerParams(
            dimension_semantics=("parallel", "parallel")),
    )(x, table_cat)


if __name__ == "__main__":
    # Small module-consistent shapes: batch=2, seq_len=8, d_model=32, freq='h'.
    B, L, D = 2, 8, 32
    freq = "h"  # 4 feature columns: month, day, weekday, hour

    key = jax.random.PRNGKey(0)
    km, kd, kw, kh = jax.random.split(key, 4)
    month = jax.random.randint(km, (B, L), 0, 13)
    day = jax.random.randint(kd, (B, L), 0, 32)
    weekday = jax.random.randint(kw, (B, L), 0, 7)
    hour = jax.random.randint(kh, (B, L), 0, 24)
    x_int = jnp.stack([month, day, weekday, hour], axis=-1)       # [B, L, 4]
    x = x_int.astype(jnp.float32)  # module does x.long(); kernel casts inside

    table_cat, offsets = build_temporal_tables(D, freq)
    out = jax.block_until_ready(temporal_embedding(x, table_cat, offsets))

    # Pure-JAX reference with the same fixed sinusoidal tables.
    sizes = [13, 32, 7, 24]
    tabs = [_fixed_embedding_table(s, D) for s in sizes]
    ref = sum(jnp.take(tabs[f], x_int[..., f], axis=0) for f in range(4))

    assert out.shape == (B, L, D), out.shape
    assert jnp.allclose(out, ref, atol=1e-5, rtol=1e-5)
    print("KERNEL_OK")
</pallas_src>

<mosaic_0001>
module attributes {stable_mosaic.version = 11 : i64} {
  func.func @_temporal_kernel(%arg0: i32, %arg1: i32, %arg2: memref<1x8x4xf32, #tpu.memory_space<vmem>>, %arg3: memref<128x32xf32, #tpu.memory_space<vmem>>, %arg4: memref<1x8x32xf32, #tpu.memory_space<vmem>>) attributes {dimension_semantics = [#tpu.dimension_semantics<parallel>, #tpu.dimension_semantics<parallel>], iteration_bounds = array<i64: 2, 1>, scalar_prefetch = 0 : i64, scratch_operands = 0 : i64, tpu.core_type = #tpu.core_type<tc>, window_params = [{transform_indices = @transform_0, window_bounds = array<i64: 1, 8, 4>}, {pipeline_mode = #tpu.pipeline_mode<synchronous>, transform_indices = @transform_1, window_bounds = array<i64: 128, 32>}, {transform_indices = @transform_2, window_bounds = array<i64: 1, 8, 32>}]} {
    %c0 = arith.constant 0 : index
    %c0_0 = arith.constant 0 : index
    %c0_1 = arith.constant 0 : index
    %0 = vector.load %arg2[%c0, %c0_0, %c0_1] : memref<1x8x4xf32, #tpu.memory_space<vmem>>, vector<1x8x4xf32>
    %1 = vector.shape_cast %0 : vector<1x8x4xf32> to vector<8x4xf32>
    %2 = arith.fptosi %1 : vector<8x4xf32> to vector<8x4xi32>
    %3 = tpu.iota {dimensions = array<i32: 1>} : vector<8x128xi32>
    %cst = arith.constant 0.000000e+00 : f32
    %4 = vector.broadcast %cst : f32 to vector<8x128xf32>
    %5 = vector.extract_strided_slice %2 {offsets = [0, 0], sizes = [8, 1], strides = [1, 1]} : vector<8x4xi32> to vector<8x1xi32>
    %c0_i32 = arith.constant 0 : i32
    %6 = vector.broadcast %c0_i32 : i32 to vector<8x1xi32>
    %7 = arith.addi %5, %6 : vector<8x1xi32>
    %8 = vector.broadcast %7 : vector<8x1xi32> to vector<8x128xi32>
    %9 = arith.cmpi eq, %3, %8 : vector<8x128xi32>
    %10 = arith.extui %9 : vector<8x128xi1> to vector<8x128xi32>
    %11 = arith.sitofp %10 : vector<8x128xi32> to vector<8x128xf32>
    %12 = arith.addf %4, %11 : vector<8x128xf32>
    %13 = vector.extract_strided_slice %2 {offsets = [0, 1], sizes = [8, 1], strides = [1, 1]} : vector<8x4xi32> to vector<8x1xi32>
    %c13_i32 = arith.constant 13 : i32
    %14 = vector.broadcast %c13_i32 : i32 to vector<8x1xi32>
    %15 = arith.addi %13, %14 : vector<8x1xi32>
    %16 = vector.broadcast %15 : vector<8x1xi32> to vector<8x128xi32>
    %17 = arith.cmpi eq, %3, %16 : vector<8x128xi32>
    %18 = arith.extui %17 : vector<8x128xi1> to vector<8x128xi32>
    %19 = arith.sitofp %18 : vector<8x128xi32> to vector<8x128xf32>
    %20 = arith.addf %12, %19 : vector<8x128xf32>
    %21 = vector.extract_strided_slice %2 {offsets = [0, 2], sizes = [8, 1], strides = [1, 1]} : vector<8x4xi32> to vector<8x1xi32>
    %c45_i32 = arith.constant 45 : i32
    %22 = vector.broadcast %c45_i32 : i32 to vector<8x1xi32>
    %23 = arith.addi %21, %22 : vector<8x1xi32>
    %24 = vector.broadcast %23 : vector<8x1xi32> to vector<8x128xi32>
    %25 = arith.cmpi eq, %3, %24 : vector<8x128xi32>
    %26 = arith.extui %25 : vector<8x128xi1> to vector<8x128xi32>
    %27 = arith.sitofp %26 : vector<8x128xi32> to vector<8x128xf32>
    %28 = arith.addf %20, %27 : vector<8x128xf32>
    %29 = vector.extract_strided_slice %2 {offsets = [0, 3], sizes = [8, 1], strides = [1, 1]} : vector<8x4xi32> to vector<8x1xi32>
    %c52_i32 = arith.constant 52 : i32
    %30 = vector.broadcast %c52_i32 : i32 to vector<8x1xi32>
    %31 = arith.addi %29, %30 : vector<8x1xi32>
    %32 = vector.broadcast %31 : vector<8x1xi32> to vector<8x128xi32>
    %33 = arith.cmpi eq, %3, %32 : vector<8x128xi32>
    %34 = arith.extui %33 : vector<8x128xi1> to vector<8x128xi32>
    %35 = arith.sitofp %34 : vector<8x128xi32> to vector<8x128xf32>
    %36 = arith.addf %28, %35 : vector<8x128xf32>
    %c0_2 = arith.constant 0 : index
    %c0_3 = arith.constant 0 : index
    %37 = vector.load %arg3[%c0_2, %c0_3] : memref<128x32xf32, #tpu.memory_space<vmem>>, vector<128x32xf32>
    %cst_4 = arith.constant dense<0.000000e+00> : vector<8x32xf32>
    %38 = tpu.matmul %36, %37, %cst_4 {dimension_numbers = #tpu.dot_dimension_numbers<[1], [0], [0], [1], [0, 0, 1, 1], [], []>} : vector<8x128xf32>, vector<128x32xf32>, vector<8x32xf32> -> vector<8x32xf32>
    %c0_5 = arith.constant 0 : index
    %c0_6 = arith.constant 0 : index
    %c0_7 = arith.constant 0 : index
    %39 = vector.load %arg4[%c0_5, %c0_6, %c0_7] : memref<1x8x32xf32, #tpu.memory_space<vmem>>, vector<1x8x32xf32>
    %40 = vector.shape_cast %39 : vector<1x8x32xf32> to vector<8x32xf32>
    %41 = vector.shape_cast %38 : vector<8x32xf32> to vector<1x8x32xf32>
    tpu.vector_store %arg4[%c0_5, %c0_6, %c0_7], %41 {strides = array<i32>} : memref<1x8x32xf32, #tpu.memory_space<vmem>>, vector<1x8x32xf32>,
    return
  }
  func.func @transform_0(%arg0: i32, %arg1: i32) -> (i32, i32, i32) {
    %c0_i32 = arith.constant 0 : i32
    %c0_i32_0 = arith.constant 0 : i32
    return %arg0, %arg1, %c0_i32 : i32, i32, i32
  }
  func.func @transform_1(%arg0: i32, %arg1: i32) -> (i32, i32) {
    %c0_i32 = arith.constant 0 : i32
    %c0_i32_0 = arith.constant 0 : i32
    %c0_i32_1 = arith.constant 0 : i32
    return %c0_i32, %c0_i32_0 : i32, i32
  }
  func.func @transform_2(%arg0: i32, %arg1: i32) -> (i32, i32, i32) {
    %c0_i32 = arith.constant 0 : i32
    %c0_i32_0 = arith.constant 0 : i32
    return %arg0, %arg1, %c0_i32 : i32, i32, i32
  }
}

</mosaic_0001>

<llo_original>
// kernel: tpu_custom_call.1
$region0: #{tpu_custom_call.1}
  #allocation0 [shape = 'u32[]', space=smem, size = 0x4, offset = 0x4, fixed_abs, tag = 'smem constant byte address 0x4 - core index']
  #allocation1 [shape = 'u32[144,128]{1,0:T(1,128)}', space=vmem, size = 0x12000, scoped, tag = 'internal scratch']
  %s0 = inlined_call_operand.vmem [shape: f32[2,8,4], index: 0, kind: input, shape index: {}]
  %s1 = inlined_call_operand.vmem [shape: f32[128,32], index: 1, kind: input, shape index: {}]
  %s2 = inlined_call_operand.hbm [shape: f32[2,8,32], index: 2, kind: output, shape index: {}]
  %s3 = sld [smem:[#allocation0]]
  $region41: #{tpu_custom_call.1} parent=0
    _
  %s5 = ssub.s32 1, %s3
  %s6 = scalar_select 0, %s5, %s3
  $region1: #{tpu_custom_call.1} parent=0
    #allocation2 [shape = 'u8[8192]{0}', space=vmem, size = 0x2000, scoped, tag = 'output window, operand 0']
    #allocation3 [shape = 's32[2]{0}', space=sflag, size = 0x8, scoped, tag = 'scoped memory for tpu_custom_call.1']
    %7 = vsyncpa [#allocation3], 0
    %s8 = scalar_lea.sflag [#allocation3], 1
    %9 = vsyncpa %s8, 0
    loop: start=0, step=1, limit=4
    $region2: #{tpu_custom_call.1} parent=1 // loop_pre_header
      _
    $region3: #{tpu_custom_call.1} parent=1 // loop_header
      %s11 = sphi 0, %s15
      %p12 = scmp.ge.s32.totalorder %s11, 4
      %s18 = sphi 0, %s30
      %s19 = sphi 0, %s26
      %s20 = sphi 0, %s18
      %s21 = sphi 0, %s19
      %s22 = sphi 0, %s20
      %s23 = sphi 0, %s21
      %s35 = sphi 0, %s37
      %s38 = sphi 0, %s35
      %s39 = sphi 0, %s38
      %s55 = sphi 0, %s39
      %s59 = sphi 0, %s59
      %s61 = sphi 0, %s59
      %s62 = sphi 0, %s61
      %s76 = sphi 0, %s62
      %s84 = sphi 0, %s86
      %s87 = sphi 0, %s84
      %s88 = sphi 0, %s87
      %s104 = sphi 0, %s88
    $region4: #{tpu_custom_call.1} parent=1 // loop_header_branch
      %14 = sbr.rel (%p12) target = $region8
    $region5: #{tpu_custom_call.1} parent=1 // loop_body
      %s16 = ssub.s32 %s11, 1
      %s17 = ssub.s32 %s11, 2
      %s24 = sadd.s32 1, %s19
      %p25 = scmp.ge.s32.totalorder %s24, 1
      %s26 = scalar_select %p25, 0, %s24
      %s27 = sadd.s32 1, %s18
      %s28 = scalar_select %p25, %s27, %s18
      %p29 = scmp.ge.s32.totalorder %s28, 2
      %s30 = scalar_select %p29, 0, %s28
      %s31 = ssub.s32 %s18, %s30
      %s32 = ssub.s32 %s19, %s26
      %s33 = sor.u32 %s31, %s32
      %p34 = scmp.eq.s32.totalorder %s33, 0
      %s36 = sadd.s32 %s35, 1
      %s37 = scalar_select %p34, %s35, %s36
      %p40 = pneg %p34
      %p41 = scmp.eq.s32.totalorder %s11, 1
      %p42 = por %p40, %p41
      %p43 = scmp.ne.s32.totalorder %s35, %s38
      %p44 = scmp.eq.s32.totalorder %s11, 0
      %p45 = por %p43, %p44
      %p46 = scmp.ne.s32.totalorder %s35, %s38
      %p47 = scmp.eq.s32.totalorder %s16, 1
      %p48 = por %p46, %p47
      %p49 = scmp.ne.s32.totalorder %s38, %s39
      %p50 = scmp.eq.s32.totalorder %s16, 0
      %p51 = por %p49, %p50
      %p52 = scmp.ne.s32.totalorder %s38, %s39
      %p53 = scmp.eq.s32.totalorder %s17, 1
      %p54 = por %p52, %p53
      %p56 = scmp.ne.s32.totalorder %s39, %s55
      %p57 = scmp.eq.s32.totalorder %s17, 0
      %p58 = por %p56, %p57
      %s60 = sadd.s32 %s59, 1
      %p63 = scmp.eq.s32.totalorder %s11, 1
      %p64 = scmp.ne.s32.totalorder %s59, %s61
      %p65 = scmp.eq.s32.totalorder %s11, 0
      %p66 = por %p64, %p65
      %p67 = scmp.ne.s32.totalorder %s59, %s61
      %p68 = scmp.eq.s32.totalorder %s16, 1
      %p69 = por %p67, %p68
      %p70 = scmp.ne.s32.totalorder %s61, %s62
      %p71 = scmp.eq.s32.totalorder %s16, 0
      %p72 = por %p70, %p71
      %p73 = scmp.ne.s32.totalorder %s61, %s62
      %p74 = scmp.eq.s32.totalorder %s17, 1
      %p75 = por %p73, %p74
      %p77 = scmp.ne.s32.totalorder %s62, %s76
      %p78 = scmp.eq.s32.totalorder %s17, 0
      %p79 = por %p77, %p78
      %s80 = ssub.s32 %s18, %s30
      %s81 = ssub.s32 %s19, %s26
      %s82 = sor.u32 %s80, %s81
      %p83 = scmp.eq.s32.totalorder %s82, 0
      %s85 = sadd.s32 %s84, 1
      %s86 = scalar_select %p83, %s84, %s85
      %p89 = pneg %p83
      %p90 = scmp.eq.s32.totalorder %s11, 1
      %p91 = por %p89, %p90
      %p92 = scmp.ne.s32.totalorder %s84, %s87
      %p93 = scmp.eq.s32.totalorder %s11, 0
      %p94 = por %p92, %p93
      %p95 = scmp.ne.s32.totalorder %s84, %s87
      %p96 = scmp.eq.s32.totalorder %s16, 1
      %p97 = por %p95, %p96
      %p98 = scmp.ne.s32.totalorder %s87, %s88
      %p99 = scmp.eq.s32.totalorder %s16, 0
      %p100 = por %p98, %p99
      %p101 = scmp.ne.s32.totalorder %s87, %s88
      %p102 = scmp.eq.s32.totalorder %s17, 1
      %p103 = por %p101, %p102
      %p105 = scmp.ne.s32.totalorder %s88, %s104
      %p106 = scmp.eq.s32.totalorder %s17, 0
      %p107 = por %p105, %p106
      %p108 = scmp.le.s32.totalorder 1, %s11
      %p109 = scmp.lt.s32.totalorder %s11, 3
      %p110 = pnand %p108, %p109
      %p111 = pneg %p110
      // Predicated region
      $region9: #{tpu_custom_call.1} parent=5 // pred_check
        _
      $region10: #{tpu_custom_call.1} parent=5 // pred_check_branch
        %113 = sbr.rel (%p110) target = $region12
      $region11: #{tpu_custom_call.1} parent=5 // pred_region
        %s114 = ssub.s32 %s11, 1
        // Predicated region
        $region13: #{tpu_custom_call.1} parent=11 // pred_check
          %p115 = pneg %p72
        $region14: #{tpu_custom_call.1} parent=11 // pred_check_branch
          %117 = sbr.rel (%p115) target = $region16
        $region15: #{tpu_custom_call.1} parent=11 // pred_region
          _
        $region16: #{tpu_custom_call.1} parent=11 // pred_fallthru
          _
      $region12: #{tpu_custom_call.1} parent=5 // pred_fallthru
        _
      %p118 = scmp.lt.s32.totalorder %s11, 2
      // Predicated region
      $region17: #{tpu_custom_call.1} parent=5 // pred_check
        %p119 = pneg %p118
      $region18: #{tpu_custom_call.1} parent=5 // pred_check_branch
        %121 = sbr.rel (%p119) target = $region20
      $region19: #{tpu_custom_call.1} parent=5 // pred_region
        // Predicated region
        $region21: #{tpu_custom_call.1} parent=19 // pred_check
          %p122 = pneg %p45
        $region22: #{tpu_custom_call.1} parent=19 // pred_check_branch
          %124 = sbr.rel (%p122) target = $region24
        $region23: #{tpu_custom_call.1} parent=19 // pred_region
          %p125 = scmp.lt.s32.totalorder %s18, 1
          %s126 = scalar_select %p125, %s18, 1
          %p127 = scmp.lt.s32.totalorder %s19, 0
          %s128 = scalar_select %p127, %s19, 0
          %s129 = sadd.s32 %s128, %s126
          %s130 = smul.addr %s129, 8
          %s131 = scalar_lea.vmem %s0, %s130
        $region24: #{tpu_custom_call.1} parent=19 // pred_fallthru
          _
      $region20: #{tpu_custom_call.1} parent=5 // pred_fallthru
        _
      %p132 = scmp.le.s32.totalorder 1, %s11
      %p133 = scmp.lt.s32.totalorder %s11, 3
      %p134 = pnand %p132, %p133
      %p135 = pneg %p134
      // Predicated region
      $region25: #{tpu_custom_call.1} parent=5 // pred_check
        _
      $region26: #{tpu_custom_call.1} parent=5 // pred_check_branch
        %137 = sbr.rel (%p134) target = $region28
      $region27: #{tpu_custom_call.1} parent=5 // pred_region
        %s138 = ssub.s32 %s11, 1
        %p139 = scmp.lt.s32.totalorder %s20, 1
        %s140 = scalar_select %p139, %s20, 1
        %p141 = scmp.lt.s32.totalorder %s21, 0
        %s142 = scalar_select %p141, %s21, 0
        %s143 = sadd.s32 %s142, %s140
        %s144 = smul.addr %s143, 8
        %s145 = scalar_lea.vmem %s0, %s144
        %p146 = pneg %p51
        %p147 = pneg %p48
        %p148 = pneg %p72
        %p149 = pneg %p69
        %p150 = pneg %p100
        %p151 = pneg %p97
        %s152 = sand.u32 %s87, 1
        %s153 = scalar_lea.sflag [#allocation3], %s152
        %s154 = sand.u32 %s87, 1
        %s155 = smul.addr %s154, 8
        %s156 = scalar_lea.vmem [#allocation2], %s155
        %p157 = scmp.lt.s32.totalorder %s20, 1
        %s158 = scalar_select %p157, %s20, 1
        %p159 = scmp.lt.s32.totalorder %s21, 0
        %s160 = scalar_select %p159, %s21, 0
        %s161 = sadd.s32 %s160, %s158
        %s162 = smul.addr %s161, 8
        %s163 = scalar_lea.vmem %s0, %s162
        %v164 = vld [vmem:[%s163] sm:$0xff]
        %v165 = vcvt.f32.s32.to.zero.pseudo %v164
        %v166 = vlaneseq
        %v167 = vand.u32 %v166, 127
        %168 = vset.pattern.permute.xlu0 0
        %169 = vperm.xlu0 %168, %v165
        %v170 = vpop.permute.xlu0 %169
        %vm171 = vcmp.eq.s32.totalorder %v167, %v170
        %v172 = vsel %vm171, 1, 0
        %v173 = vcvt.s32.f32 %v172
        %v174 = vadd.f32 %v173, 0.0
        %v175 = vadd.s32 %v165, 13
        %176 = vset.pattern.permute.xlu0 1
        %177 = vperm.xlu0 %176, %v175
        %v178 = vpop.permute.xlu0 %177
        %vm179 = vcmp.eq.s32.totalorder %v167, %v178
        %v180 = vsel %vm179, 1, 0
        %v181 = vcvt.s32.f32 %v180
        %v182 = vadd.f32 %v174, %v181
        %v183 = vadd.s32 %v165, 45
        %184 = vset.pattern.permute.xlu0 2
        %185 = vperm.xlu0 %184, %v183
        %v186 = vpop.permute.xlu0 %185
        %vm187 = vcmp.eq.s32.totalorder %v167, %v186
        %v188 = vsel %vm187, 1, 0
        %v189 = vcvt.s32.f32 %v188
        %v190 = vadd.f32 %v182, %v189
        %v191 = vadd.s32 %v165, 52
        %192 = vset.pattern.permute.xlu0 3
        %193 = vperm.xlu0 %192, %v191
        %v194 = vpop.permute.xlu0 %193
        %vm195 = vcmp.eq.s32.totalorder %v167, %v194
        %v196 = vsel %vm195, 1, 0
        %v197 = vcvt.s32.f32 %v196
        %v198 = vadd.f32 %v190, %v197
        %v199 = vld [vmem:[%s1] sm:$0xff]
        %v200 = vld [vmem:[%s1 + $0x8] sm:$0xff]
        %v201 = vld [vmem:[%s1 + $0x10] sm:$0xff]
        %v202 = vld [vmem:[%s1 + $0x18] sm:$0xff]
        %v203 = vld [vmem:[%s1 + $0x20] sm:$0xff]
        %v204 = vld [vmem:[%s1 + $0x28] sm:$0xff]
        %v205 = vld [vmem:[%s1 + $0x30] sm:$0xff]
        %v206 = vld [vmem:[%s1 + $0x38] sm:$0xff]
        %v207 = vld [vmem:[%s1 + $0x40] sm:$0xff]
        %v208 = vld [vmem:[%s1 + $0x48] sm:$0xff]
        %v209 = vld [vmem:[%s1 + $0x50] sm:$0xff]
        %v210 = vld [vmem:[%s1 + $0x58] sm:$0xff]
        %v211 = vld [vmem:[%s1 + $0x60] sm:$0xff]
        %v212 = vld [vmem:[%s1 + $0x68] sm:$0xff]
        %v213 = vld [vmem:[%s1 + $0x70] sm:$0xff]
        %v214 = vld [vmem:[%s1 + $0x78] sm:$0xff]
        %215 = vmatprep.subr.mxu0 0.0
        %216 = vmatpush1.msra.mxu0 %v214
        %217 = vmatprep.subr.mxu0 0.0
        %218 = vmatpush1.msra.mxu0 %v213
        %219 = vmatprep.subr.mxu0 0.0
        %220 = vmatpush1.msra.mxu0 %v212
        %221 = vmatprep.subr.mxu0 0.0
        %222 = vmatpush1.msra.mxu0 %v211
        %223 = vmatprep.subr.mxu0 0.0
        %224 = vmatpush1.msra.mxu0 %v210
        %225 = vmatprep.subr.mxu0 0.0
        %226 = vmatpush1.msra.mxu0 %v209
        %227 = vmatprep.subr.mxu0 0.0
        %228 = vmatpush1.msra.mxu0 %v208
        %229 = vmatprep.subr.mxu0 0.0
        %230 = vmatpush1.msra.mxu0 %v207
        %231 = vmatprep.subr.mxu0 0.0
        %232 = vmatpush1.msra.mxu0 %v206
        %233 = vmatprep.subr.mxu0 0.0
        %234 = vmatpush1.msra.mxu0 %v205
        %235 = vmatprep.subr.mxu0 0.0
        %236 = vmatpush1.msra.mxu0 %v204
        %237 = vmatprep.subr.mxu0 0.0
        %238 = vmatpush1.msra.mxu0 %v203
        %239 = vmatprep.subr.mxu0 0.0
        %240 = vmatpush1.msra.mxu0 %v202
        %241 = vmatprep.subr.mxu0 0.0
        %242 = vmatpush1.msra.mxu0 %v201
        %243 = vmatprep.subr.mxu0 0.0
        %244 = vmatpush1.msra.mxu0 %v200
        %245 = vmatprep.subr.mxu0 0.0
        %246 = vmatpush1.msra.mxu0 %v199
        %247 = vmatprep.subr.mxu0 0.0
        %248 = vmatpush2.msra.mxu0 0.0
        %249 = vmatprep.subr.mxu0 0.0
        %250 = vmatpush2.msra.mxu0 0.0
        %251 = vmatprep.subr.mxu0 0.0
        %252 = vmatpush2.msra.mxu0 0.0
        %253 = vmatprep.subr.mxu0 0.0
        %254 = vmatpush2.msra.mxu0 0.0
        %255 = vmatprep.subr.mxu0 0.0
        %256 = vmatpush2.msra.mxu0 0.0
        %257 = vmatprep.subr.mxu0 0.0
        %258 = vmatpush2.msra.mxu0 0.0
        %259 = vmatprep.subr.mxu0 0.0
        %260 = vmatpush2.msra.mxu0 0.0
        %261 = vmatprep.subr.mxu0 0.0
        %262 = vmatpush2.msra.mxu0 0.0
        %263 = vmatprep.subr.mxu0 0.0
        %264 = vmatpush2.msra.mxu0 0.0
        %265 = vmatprep.subr.mxu0 0.0
        %266 = vmatpush2.msra.mxu0 0.0
        %267 = vmatprep.subr.mxu0 0.0
        %268 = vmatpush2.msra.mxu0 0.0
        %269 = vmatprep.subr.mxu0 0.0
        %270 = vmatpush2.msra.mxu0 0.0
        %271 = vmatprep.subr.mxu0 0.0
        %272 = vmatpush2.msra.mxu0 0.0
        %273 = vmatprep.subr.mxu0 0.0
        %274 = vmatpush2.msra.mxu0 0.0
        %275 = vmatprep.subr.mxu0 0.0
        %276 = vmatpush2.msra.mxu0 0.0
        %277 = vmatprep.subr.mxu0 0.0
        %278 = vmatpush2.msra.mxu0 0.0
        %279 = vmatprep.mubr.f32.mxu0 0.0
        %280 = vmatmul.mubr.f32.gmra.mxu0 %v198
        %v281 = vpop.f32.mrf.mxu0
        %v282 = vadd.f32 0.0, %v281
        %v283 = vpop.f32.mrf.mxu0
        %284 = vdwg.mxu0
        %vm285 = vcmask 261120
        %286 = vst.msk [vmem:[%s156] sm:$0xff] %vm285, %v282
        %s287 = sand.u32 %s87, 1
        %s288 = scalar_lea.sflag [#allocation3], %s287
        %s289 = sand.u32 %s87, 1
        %s290 = smul.addr %s289, 8
        %s291 = scalar_lea.vmem [#allocation2], %s290
        // Predicated region
        $region29: #{tpu_custom_call.1} parent=27 // pred_check
          %p292 = pneg %p97
        $region30: #{tpu_custom_call.1} parent=27 // pred_check_branch
          %294 = sbr.rel (%p292) target = $region32
        $region31: #{tpu_custom_call.1} parent=27 // pred_region
          %s296 = ssub.s32 128, 128
          %297 = vsyncadd %s288, %s296
          %s298 = sadd.s32 %s21, %s20
          %s299 = smul.addr %s298, 128
          %s300 = scalar_lea.hbm %s2, %s299
          %s302 = sshll.u32 %s291, 4
          %s303 = int_to_ptr.vmem [resolvable:$true] %s302
          %305 = dma.vmem_to_hbm [thread:$0]  %s303, 128, %s300, %s288
        $region32: #{tpu_custom_call.1} parent=27 // pred_fallthru
          _
      $region28: #{tpu_custom_call.1} parent=5 // pred_fallthru
        _
      %p306 = scmp.le.s32.totalorder 2, %s11
      // Predicated region
      $region33: #{tpu_custom_call.1} parent=5 // pred_check
        %p307 = pneg %p306
      $region34: #{tpu_custom_call.1} parent=5 // pred_check_branch
        %309 = sbr.rel (%p307) target = $region36
      $region35: #{tpu_custom_call.1} parent=5 // pred_region
        %s310 = ssub.s32 %s11, 2
        // Predicated region
        $region37: #{tpu_custom_call.1} parent=35 // pred_check
          %p311 = pneg %p103
        $region38: #{tpu_custom_call.1} parent=35 // pred_check_branch
          %313 = sbr.rel (%p311) target = $region40
        $region39: #{tpu_custom_call.1} parent=35 // pred_region
          %s314 = sand.u32 %s88, 1
          %s315 = scalar_lea.sflag [#allocation3], %s314
          %s316 = sand.u32 %s88, 1
          %s317 = smul.addr %s316, 8
          %s318 = scalar_lea.vmem [#allocation2], %s317
          %319 = dma.done %s315, 128
        $region40: #{tpu_custom_call.1} parent=35 // pred_fallthru
          _
      $region36: #{tpu_custom_call.1} parent=5 // pred_fallthru
        _
    $region6: #{tpu_custom_call.1} parent=1 // loop_footer
      %s15 = sadd.s32 1, %s11
    $region7: #{tpu_custom_call.1} parent=1 // loop_footer_branch
      %10 = sbr.rel target = $region3
    $region8: #{tpu_custom_call.1} parent=1 // loop_exit
      _
    %320 = vsyncpa [#allocation3], 1
    %s321 = scalar_lea.sflag [#allocation3], 1
    %322 = vsyncpa %s321, 1

</llo_original>
